<compile_context>
chip_gen: v6e
topology: v6e:2x2x1
jax: 0.10.0
libtpu: 0.0.40
codegen_flags: <defaults>
</compile_context>

<pallas_src>
import functools

import jax
import jax.numpy as jnp
from jax.experimental import pallas as pl
from jax.experimental.pallas import tpu as pltpu

_NEG_BIG = -1e30  # bias for padded pi logits -> exp() underflows to 0


def _mdn_kernel(Gp, x_ref, wh_ref, bh_ref, wheads_ref, bheads_ref, out_ref):
    # Hidden layer on the VPU/EUP: z_h[h, b] = tanh(w_h[h] * x[b] + b_h[h])
    z_h = jnp.tanh(wh_ref[...] * x_ref[...] + bh_ref[...])            # (H, TB)

    # Fused head projection: single (3Gp, H) x (H, TB) MXU matmul + bias.
    heads = (jnp.dot(wheads_ref[...], z_h,
                     preferred_element_type=jnp.float32)
             + bheads_ref[...])                                        # (3Gp, TB)

    logits = heads[0:Gp, :]              # pi logits (padded rows = -1e30)
    mu = heads[Gp:2 * Gp, :]             # mu
    log_sigma = heads[2 * Gp:3 * Gp, :]  # log sigma

    # Numerically stable softmax over the gaussian (sublane) axis, with the
    # divide replaced by one approx EUP reciprocal + Newton refinement.
    m = jnp.max(logits, axis=0, keepdims=True)
    e = jnp.exp(logits - m)
    s = jnp.sum(e, axis=0, keepdims=True)                              # (1, TB)
    inv = pl.reciprocal(s, approx=True)
    inv = inv * (2.0 - s * inv)          # Newton step 1
    inv = inv * (2.0 - s * inv)          # Newton step 2 -> ~f32 exact
    pi = e * inv

    # Single fused, lane-dense output block (one DMA stream per grid step).
    out_ref[0:Gp, :] = pi
    out_ref[Gp:2 * Gp, :] = mu
    out_ref[2 * Gp:3 * Gp, :] = jnp.exp(log_sigma)


def pack_mdn_params(params):
    """One-time host-side packing (hoisted out of the per-call hot path)."""
    G = params["w_pi"].shape[1]
    Gp = 8 * pl.cdiv(G, 8)   # pad gaussians to a multiple of 8 sublanes

    def pad_w(w):            # (H, G) -> (H, Gp)
        return jnp.pad(w.astype(jnp.float32), ((0, 0), (0, Gp - G)))

    def pad_b(b, fill=0.0):  # (1, G) -> (1, Gp)
        return jnp.pad(b.astype(jnp.float32), ((0, 0), (0, Gp - G)),
                       constant_values=fill)

    return {
        "wh_col": params["w_h"].T.astype(jnp.float32),                 # (H, 1)
        "bh_col": params["b_h"].T.astype(jnp.float32),                 # (H, 1)
        "w_heads": jnp.concatenate(
            [pad_w(params["w_pi"]), pad_w(params["w_mu"]),
             pad_w(params["w_sigma"])], axis=1).T,                     # (3Gp, H)
        "b_heads": jnp.concatenate(
            [pad_b(params["b_pi"], _NEG_BIG), pad_b(params["b_mu"]),
             pad_b(params["b_sigma"])], axis=1).T,                     # (3Gp, 1)
    }


@functools.partial(jax.jit, static_argnames=("n_gaussians", "tb_max"))
def mdn_forward(x, packed, *, n_gaussians, tb_max=8192):
    """x: (B, 1) f32.  packed: output of pack_mdn_params.

    Returns (pi, mu, sigma), each (B, n_gaussians), matching PyTorch MDN.forward.
    """
    B = x.shape[0]
    H = packed["wh_col"].shape[0]
    Gp = packed["w_heads"].shape[0] // 3
    G = n_gaussians

    # --- batch tile selection -------------------------------------------
    # Multiple of 128 lanes, up to tb_max; force >=2 grid steps when the
    # batch spans >=2 lane blocks so both v7x TensorCores get work.
    blocks = pl.cdiv(B, 128)
    max_blocks_per_tile = max(1, tb_max // 128)
    min_steps = 2 if blocks >= 2 else 1
    steps = max(min_steps, pl.cdiv(blocks, max_blocks_per_tile))
    tb = 128 * pl.cdiv(blocks, steps)
    grid_steps = pl.cdiv(B, tb)
    Bp = grid_steps * tb

    # Batch-on-lanes layout, zero-padded to the tile boundary.
    x_row = jnp.zeros((1, Bp), jnp.float32).at[0, :B].set(x[:, 0])

    out = pl.pallas_call(
        functools.partial(_mdn_kernel, Gp),
        out_shape=jax.ShapeDtypeStruct((3 * Gp, Bp), jnp.float32),
        grid_spec=pltpu.PrefetchScalarGridSpec(
            num_scalar_prefetch=0,
            grid=(grid_steps,),
            in_specs=[
                pl.BlockSpec((1, tb), lambda i: (0, i)),        # x (lanes=batch)
                pl.BlockSpec((H, 1), lambda i: (0, 0)),         # w_h column
                pl.BlockSpec((H, 1), lambda i: (0, 0)),         # b_h column
                pl.BlockSpec((3 * Gp, H), lambda i: (0, 0)),    # fused head W
                pl.BlockSpec((3 * Gp, 1), lambda i: (0, 0)),    # fused head b
            ],
            out_specs=pl.BlockSpec((3 * Gp, tb), lambda i: (0, i)),
        ),
        compiler_params=pltpu.CompilerParams(
            dimension_semantics=("parallel",),
            vmem_limit_bytes=32 * 1024 * 1024),
    )(x_row, packed["wh_col"], packed["bh_col"],
      packed["w_heads"], packed["b_heads"])

    # Single transpose of the fused block, then cheap last-axis splits.
    out_t = out[:, :B].T                      # (B, 3Gp)
    pi = out_t[:, 0:G]
    mu = out_t[:, Gp:Gp + G]
    sigma = out_t[:, 2 * Gp:2 * Gp + G]
    return pi, mu, sigma


def mdn_reference(x, params):
    """Pure-JAX reference mirroring the PyTorch forward exactly."""
    z_h = jnp.tanh(x @ params["w_h"] + params["b_h"])
    pi = jax.nn.softmax(z_h @ params["w_pi"] + params["b_pi"], axis=-1)
    mu = z_h @ params["w_mu"] + params["b_mu"]
    sigma = jnp.exp(z_h @ params["w_sigma"] + params["b_sigma"])
    return pi, mu, sigma


def init_params(key, n_hidden, n_gaussians):
    """Deterministic synthetic init (uniform, roughly torch fan-in scaling)."""
    ks = jax.random.split(key, 8)

    def unif(k, shape, fan_in):
        bound = 1.0 / jnp.sqrt(jnp.float32(fan_in))
        return jax.random.uniform(k, shape, jnp.float32, -bound, bound)

    return {
        "w_h":     unif(ks[0], (1, n_hidden), 1),
        "b_h":     unif(ks[1], (1, n_hidden), 1),
        "w_pi":    unif(ks[2], (n_hidden, n_gaussians), n_hidden),
        "b_pi":    unif(ks[3], (1, n_gaussians), n_hidden),
        "w_mu":    unif(ks[4], (n_hidden, n_gaussians), n_hidden),
        "b_mu":    unif(ks[5], (1, n_gaussians), n_hidden),
        "w_sigma": unif(ks[6], (n_hidden, n_gaussians), n_hidden),
        "b_sigma": unif(ks[7], (1, n_gaussians), n_hidden),
    }


if __name__ == "__main__":
    n_hidden, n_gaussians = 32, 8
    batch = 16

    key = jax.random.PRNGKey(0)
    k_x, k_p = jax.random.split(key)
    x = jax.random.normal(k_x, (batch, 1), jnp.float32)
    params = init_params(k_p, n_hidden, n_gaussians)

    packed = pack_mdn_params(params)            # one-time packing (hoisted)
    pi, mu, sigma = mdn_forward(x, packed, n_gaussians=n_gaussians)
    jax.block_until_ready((pi, mu, sigma))

    # Correctness check against the pure-JAX reference of the PyTorch forward.
    pi_r, mu_r, sigma_r = mdn_reference(x, params)
    assert pi.shape == (batch, n_gaussians)
    assert mu.shape == (batch, n_gaussians)
    assert sigma.shape == (batch, n_gaussians)
    assert jnp.allclose(pi, pi_r, atol=2e-5, rtol=2e-5)
    assert jnp.allclose(mu, mu_r, atol=1e-5, rtol=1e-5)
    assert jnp.allclose(sigma, sigma_r, atol=1e-5, rtol=1e-5)
    assert jnp.allclose(jnp.sum(pi, axis=-1), 1.0, atol=1e-5)

    print("KERNEL_OK")
</pallas_src>

<mosaic_0001>
module attributes {stable_mosaic.version = 11 : i64} {
  func.func @_mdn_kernel(%arg0: i32, %arg1: memref<1x128xf32, #tpu.memory_space<vmem>>, %arg2: memref<32x1xf32, #tpu.memory_space<vmem>>, %arg3: memref<32x1xf32, #tpu.memory_space<vmem>>, %arg4: memref<24x32xf32, #tpu.memory_space<vmem>>, %arg5: memref<24x1xf32, #tpu.memory_space<vmem>>, %arg6: memref<24x128xf32, #tpu.memory_space<vmem>>) attributes {dimension_semantics = [#tpu.dimension_semantics<parallel>], iteration_bounds = array<i64: 1>, scalar_prefetch = 0 : i64, scratch_operands = 0 : i64, tpu.core_type = #tpu.core_type<tc>, window_params = [{transform_indices = @transform_0, window_bounds = array<i64: 1, 128>}, {pipeline_mode = #tpu.pipeline_mode<synchronous>, transform_indices = @transform_1, window_bounds = array<i64: 32, 1>}, {pipeline_mode = #tpu.pipeline_mode<synchronous>, transform_indices = @transform_2, window_bounds = array<i64: 32, 1>}, {pipeline_mode = #tpu.pipeline_mode<synchronous>, transform_indices = @transform_3, window_bounds = array<i64: 24, 32>}, {pipeline_mode = #tpu.pipeline_mode<synchronous>, transform_indices = @transform_4, window_bounds = array<i64: 24, 1>}, {transform_indices = @transform_5, window_bounds = array<i64: 24, 128>}]} {
    %c0 = arith.constant 0 : index
    %c0_0 = arith.constant 0 : index
    %0 = vector.load %arg2[%c0, %c0_0] : memref<32x1xf32, #tpu.memory_space<vmem>>, vector<32x1xf32>
    %c0_1 = arith.constant 0 : index
    %c0_2 = arith.constant 0 : index
    %1 = vector.load %arg1[%c0_1, %c0_2] : memref<1x128xf32, #tpu.memory_space<vmem>>, vector<1x128xf32>
    %2 = vector.broadcast %0 : vector<32x1xf32> to vector<32x128xf32>
    %3 = vector.broadcast %1 : vector<1x128xf32> to vector<32x128xf32>
    %4 = arith.mulf %2, %3 : vector<32x128xf32>
    %c0_3 = arith.constant 0 : index
    %c0_4 = arith.constant 0 : index
    %5 = vector.load %arg3[%c0_3, %c0_4] : memref<32x1xf32, #tpu.memory_space<vmem>>, vector<32x1xf32>
    %6 = vector.broadcast %5 : vector<32x1xf32> to vector<32x128xf32>
    %7 = arith.addf %4, %6 : vector<32x128xf32>
    %8 = math.tanh %7 : vector<32x128xf32>
    %c0_5 = arith.constant 0 : index
    %c0_6 = arith.constant 0 : index
    %9 = vector.load %arg4[%c0_5, %c0_6] : memref<24x32xf32, #tpu.memory_space<vmem>>, vector<24x32xf32>
    %cst = arith.constant dense<0.000000e+00> : vector<24x128xf32>
    %10 = tpu.matmul %9, %8, %cst {dimension_numbers = #tpu.dot_dimension_numbers<[1], [0], [0], [1], [0, 0, 1, 1], [], []>} : vector<24x32xf32>, vector<32x128xf32>, vector<24x128xf32> -> vector<24x128xf32>
    %c0_7 = arith.constant 0 : index
    %c0_8 = arith.constant 0 : index
    %11 = vector.load %arg5[%c0_7, %c0_8] : memref<24x1xf32, #tpu.memory_space<vmem>>, vector<24x1xf32>
    %12 = vector.broadcast %11 : vector<24x1xf32> to vector<24x128xf32>
    %13 = arith.addf %10, %12 : vector<24x128xf32>
    %14 = vector.extract_strided_slice %13 {offsets = [0, 0], sizes = [8, 128], strides = [1, 1]} : vector<24x128xf32> to vector<8x128xf32>
    %15 = vector.extract_strided_slice %13 {offsets = [8, 0], sizes = [8, 128], strides = [1, 1]} : vector<24x128xf32> to vector<8x128xf32>
    %16 = vector.extract_strided_slice %13 {offsets = [16, 0], sizes = [8, 128], strides = [1, 1]} : vector<24x128xf32> to vector<8x128xf32>
    %cst_9 = arith.constant dense<0xFF800000> : vector<128xf32>
    %17 = vector.multi_reduction <maximumf>, %14, %cst_9 [0] : vector<8x128xf32> to vector<128xf32>
    %18 = vector.shape_cast %17 : vector<128xf32> to vector<1x128xf32>
    %19 = vector.broadcast %18 : vector<1x128xf32> to vector<8x128xf32>
    %20 = arith.subf %14, %19 : vector<8x128xf32>
    %21 = math.exp %20 : vector<8x128xf32>
    %cst_10 = arith.constant dense<0.000000e+00> : vector<128xf32>
    %22 = vector.multi_reduction <add>, %21, %cst_10 [0] : vector<8x128xf32> to vector<128xf32>
    %23 = vector.shape_cast %22 : vector<128xf32> to vector<1x128xf32>
    %24 = tpu.reciprocal %23 {approx = true} : vector<1x128xf32> -> vector<1x128xf32>
    %25 = arith.mulf %23, %24 : vector<1x128xf32>
    %cst_11 = arith.constant 2.000000e+00 : f32
    %26 = vector.broadcast %cst_11 : f32 to vector<1x128xf32>
    %27 = arith.subf %26, %25 : vector<1x128xf32>
    %28 = arith.mulf %24, %27 : vector<1x128xf32>
    %29 = arith.mulf %23, %28 : vector<1x128xf32>
    %cst_12 = arith.constant 2.000000e+00 : f32
    %30 = vector.broadcast %cst_12 : f32 to vector<1x128xf32>
    %31 = arith.subf %30, %29 : vector<1x128xf32>
    %32 = arith.mulf %28, %31 : vector<1x128xf32>
    %33 = vector.broadcast %32 : vector<1x128xf32> to vector<8x128xf32>
    %34 = arith.mulf %21, %33 : vector<8x128xf32>
    %c0_13 = arith.constant 0 : index
    %c0_14 = arith.constant 0 : index
    %35 = vector.load %arg6[%c0_13, %c0_14] : memref<24x128xf32, #tpu.memory_space<vmem>>, vector<8x128xf32>
    tpu.vector_store %arg6[%c0_13, %c0_14], %34 {strides = array<i32>} : memref<24x128xf32, #tpu.memory_space<vmem>>, vector<8x128xf32>,
    %c8 = arith.constant 8 : index
    %c0_15 = arith.constant 0 : index
    %36 = vector.load %arg6[%c8, %c0_15] : memref<24x128xf32, #tpu.memory_space<vmem>>, vector<8x128xf32>
    tpu.vector_store %arg6[%c8, %c0_15], %15 {strides = array<i32>} : memref<24x128xf32, #tpu.memory_space<vmem>>, vector<8x128xf32>,
    %37 = math.exp %16 : vector<8x128xf32>
    %c16 = arith.constant 16 : index
    %c0_16 = arith.constant 0 : index
    %38 = vector.load %arg6[%c16, %c0_16] : memref<24x128xf32, #tpu.memory_space<vmem>>, vector<8x128xf32>
    tpu.vector_store %arg6[%c16, %c0_16], %37 {strides = array<i32>} : memref<24x128xf32, #tpu.memory_space<vmem>>, vector<8x128xf32>,
    return
  }
  func.func @transform_0(%arg0: i32) -> (i32, i32) {
    %c0_i32 = arith.constant 0 : i32
    %c0_i32_0 = arith.constant 0 : i32
    return %c0_i32, %arg0 : i32, i32
  }
  func.func @transform_1(%arg0: i32) -> (i32, i32) {
    %c0_i32 = arith.constant 0 : i32
    %c0_i32_0 = arith.constant 0 : i32
    %c0_i32_1 = arith.constant 0 : i32
    return %c0_i32, %c0_i32_0 : i32, i32
  }
  func.func @transform_2(%arg0: i32) -> (i32, i32) {
    %c0_i32 = arith.constant 0 : i32
    %c0_i32_0 = arith.constant 0 : i32
    %c0_i32_1 = arith.constant 0 : i32
    return %c0_i32, %c0_i32_0 : i32, i32
  }
  func.func @transform_3(%arg0: i32) -> (i32, i32) {
    %c0_i32 = arith.constant 0 : i32
    %c0_i32_0 = arith.constant 0 : i32
    %c0_i32_1 = arith.constant 0 : i32
    return %c0_i32, %c0_i32_0 : i32, i32
  }
  func.func @transform_4(%arg0: i32) -> (i32, i32) {
    %c0_i32 = arith.constant 0 : i32
    %c0_i32_0 = arith.constant 0 : i32
    %c0_i32_1 = arith.constant 0 : i32
    return %c0_i32, %c0_i32_0 : i32, i32
  }
  func.func @transform_5(%arg0: i32) -> (i32, i32) {
    %c0_i32 = arith.constant 0 : i32
    %c0_i32_0 = arith.constant 0 : i32
    return %c0_i32, %arg0 : i32, i32
  }
}

</mosaic_0001>

<llo_original>
// kernel: mdn_forward.1
$region0: #{mdn_forward.1}
  #allocation0 [shape = 'u32[]', space=smem, size = 0x4, offset = 0x4, fixed_abs, tag = 'smem constant byte address 0x4 - core index']
  #allocation1 [shape = 'u32[144,128]{1,0:T(1,128)}', space=vmem, size = 0x12000, scoped, tag = 'internal scratch']
  %s0 = inlined_call_operand.vmem [shape: f32[1,128], index: 0, kind: input, shape index: {}]
  %s1 = inlined_call_operand.vmem [shape: f32[32,1], index: 1, kind: input, shape index: {}]
  %s2 = inlined_call_operand.vmem [shape: f32[32,1], index: 2, kind: input, shape index: {}]
  %s3 = inlined_call_operand.vmem [shape: f32[24,32], index: 3, kind: input, shape index: {}]
  %s4 = inlined_call_operand.vmem [shape: f32[24,1], index: 4, kind: input, shape index: {}]
  %s5 = inlined_call_operand.vmem [shape: f32[24,128], index: 5, kind: output, shape index: {}]
  %s6 = sld [smem:[#allocation0]]
  $region30: #{mdn_forward.1} parent=0
    _
  %s8 = ssub.s32 1, %s6
  %s9 = scalar_select 0, %s8, %s6
  // Predicated region
  $region2: #{mdn_forward.1} parent=0 // pred_check
    _
  $region3: #{mdn_forward.1} parent=0 // pred_check_branch
    %11 = sbr.rel (0) target = $region5
  $region4: #{mdn_forward.1} parent=0 // pred_region
    _
  $region5: #{mdn_forward.1} parent=0 // pred_fallthru
    _
  // Predicated region
  $region6: #{mdn_forward.1} parent=0 // pred_check
    _
  $region7: #{mdn_forward.1} parent=0 // pred_check_branch
    %13 = sbr.rel (0) target = $region9
  $region8: #{mdn_forward.1} parent=0 // pred_region
    _
  $region9: #{mdn_forward.1} parent=0 // pred_fallthru
    _
  // Predicated region
  $region10: #{mdn_forward.1} parent=0 // pred_check
    _
  $region11: #{mdn_forward.1} parent=0 // pred_check_branch
    %15 = sbr.rel (0) target = $region13
  $region12: #{mdn_forward.1} parent=0 // pred_region
    _
  $region13: #{mdn_forward.1} parent=0 // pred_fallthru
    _
  // Predicated region
  $region14: #{mdn_forward.1} parent=0 // pred_check
    _
  $region15: #{mdn_forward.1} parent=0 // pred_check_branch
    %17 = sbr.rel (0) target = $region17
  $region16: #{mdn_forward.1} parent=0 // pred_region
    _
  $region17: #{mdn_forward.1} parent=0 // pred_fallthru
    _
  // Predicated region
  $region18: #{mdn_forward.1} parent=0 // pred_check
    _
  $region19: #{mdn_forward.1} parent=0 // pred_check_branch
    %19 = sbr.rel (0) target = $region21
  $region20: #{mdn_forward.1} parent=0 // pred_region
    _
  $region21: #{mdn_forward.1} parent=0 // pred_fallthru
    _
  %v20 = vld [vmem:[%s1] sm:$0xff]
  %v21 = vld [vmem:[%s1 + $0x8] sm:$0xff]
  %v22 = vld [vmem:[%s1 + $0x10] sm:$0xff]
  %v23 = vld [vmem:[%s1 + $0x18] sm:$0xff]
  %v24 = vld [vmem:[%s0] sm:$0x1]
  %26 = vset.pattern.permute.xlu0 0
  %27 = vperm.xlu0 %26, %v20
  %v28 = vpop.permute.xlu0 %27
  %31 = vset.pattern.permute.xlu0 0
  %32 = vperm.xlu0 %31, %v21
  %v33 = vpop.permute.xlu0 %32
  %36 = vset.pattern.permute.xlu0 0
  %37 = vperm.xlu0 %36, %v22
  %v38 = vpop.permute.xlu0 %37
  %41 = vset.pattern.permute.xlu0 0
  %42 = vperm.xlu0 %41, %v23
  %v43 = vpop.permute.xlu0 %42
  %v46 = vlaneseq
  %v47 = vshrl.u32 %v46, 7
  %v48 = vsub.s32 0, %v47
  %v49 = vrot.slane %v24, %v48
  %v51 = vmul.f32 %v28, %v49
  %v52 = vmul.f32 %v33, %v49
  %v53 = vmul.f32 %v38, %v49
  %v54 = vmul.f32 %v43, %v49
  %v55 = vld [vmem:[%s2] sm:$0xff]
  %v56 = vld [vmem:[%s2 + $0x8] sm:$0xff]
  %v57 = vld [vmem:[%s2 + $0x10] sm:$0xff]
  %v58 = vld [vmem:[%s2 + $0x18] sm:$0xff]
  %60 = vset.pattern.permute.xlu0 0
  %61 = vperm.xlu0 %60, %v55
  %v62 = vpop.permute.xlu0 %61
  %65 = vset.pattern.permute.xlu0 0
  %66 = vperm.xlu0 %65, %v56
  %v67 = vpop.permute.xlu0 %66
  %70 = vset.pattern.permute.xlu0 0
  %71 = vperm.xlu0 %70, %v57
  %v72 = vpop.permute.xlu0 %71
  %75 = vset.pattern.permute.xlu0 0
  %76 = vperm.xlu0 %75, %v58
  %v77 = vpop.permute.xlu0 %76
  %v79 = vadd.f32 %v51, %v62
  %v80 = vadd.f32 %v52, %v67
  %v81 = vadd.f32 %v53, %v72
  %v82 = vadd.f32 %v54, %v77
  %v83 = vtanh.pop %v79
  %v84 = vtanh.pop %v80
  %v85 = vtanh.pop %v81
  %v86 = vtanh.pop %v82
  %v87 = vld [vmem:[%s3] sm:$0xff]
  %v88 = vld [vmem:[%s3 + $0x8] sm:$0xff]
  %v89 = vld [vmem:[%s3 + $0x10] sm:$0xff]
  %v90 = vld [vmem:[%s4] sm:$0xff]
  %v91 = vld [vmem:[%s4 + $0x8] sm:$0xff]
  %v92 = vld [vmem:[%s4 + $0x10] sm:$0xff]
  %94 = vset.pattern.permute.xlu0 0
  %95 = vperm.xlu0 %94, %v90
  %v96 = vpop.permute.xlu0 %95
  %99 = vset.pattern.permute.xlu0 0
  %100 = vperm.xlu0 %99, %v91
  %v101 = vpop.permute.xlu0 %100
  %104 = vset.pattern.permute.xlu0 0
  %105 = vperm.xlu0 %104, %v92
  %v106 = vpop.permute.xlu0 %105
  %vm108 = vcmask 261120
  %v110 = vsel %vm108, %v87, 0
  %v113 = vsel %vm108, %v88, 0
  %v116 = vsel %vm108, %v89, 0
  %118 = vmatprep.subr.mxu0 0.0
  %119 = vmatpush1.msra.mxu0 0.0
  %120 = vmatprep.subr.mxu0 0.0
  %121 = vmatpush1.msra.mxu0 0.0
  %122 = vmatprep.subr.mxu0 0.0
  %123 = vmatpush1.msra.mxu0 0.0
  %124 = vmatprep.subr.mxu0 0.0
  %125 = vmatpush1.msra.mxu0 0.0
  %126 = vmatprep.subr.mxu0 0.0
  %127 = vmatpush1.msra.mxu0 0.0
  %128 = vmatprep.subr.mxu0 0.0
  %129 = vmatpush1.msra.mxu0 0.0
  %130 = vmatprep.subr.mxu0 0.0
  %131 = vmatpush1.msra.mxu0 0.0
  %132 = vmatprep.subr.mxu0 0.0
  %133 = vmatpush1.msra.mxu0 0.0
  %134 = vmatprep.subr.mxu0 0.0
  %135 = vmatpush1.msra.mxu0 0.0
  %136 = vmatprep.subr.mxu0 0.0
  %137 = vmatpush1.msra.mxu0 0.0
  %138 = vmatprep.subr.mxu0 0.0
  %139 = vmatpush1.msra.mxu0 0.0
  %140 = vmatprep.subr.mxu0 0.0
  %141 = vmatpush1.msra.mxu0 0.0
  %142 = vmatprep.subr.mxu0 0.0
  %143 = vmatpush1.msra.mxu0 %v86
  %144 = vmatprep.subr.mxu0 0.0
  %145 = vmatpush1.msra.mxu0 %v85
  %146 = vmatprep.subr.mxu0 0.0
  %147 = vmatpush1.msra.mxu0 %v84
  %148 = vmatprep.subr.mxu0 0.0
  %149 = vmatpush1.msra.mxu0 %v83
  %150 = vmatprep.subr.mxu0 0.0
  %151 = vmatpush2.msra.mxu0 0.0
  %152 = vmatprep.subr.mxu0 0.0
  %153 = vmatpush2.msra.mxu0 0.0
  %154 = vmatprep.subr.mxu0 0.0
  %155 = vmatpush2.msra.mxu0 0.0
  %156 = vmatprep.subr.mxu0 0.0
  %157 = vmatpush2.msra.mxu0 0.0
  %158 = vmatprep.subr.mxu0 0.0
  %159 = vmatpush2.msra.mxu0 0.0
  %160 = vmatprep.subr.mxu0 0.0
  %161 = vmatpush2.msra.mxu0 0.0
  %162 = vmatprep.subr.mxu0 0.0
  %163 = vmatpush2.msra.mxu0 0.0
  %164 = vmatprep.subr.mxu0 0.0
  %165 = vmatpush2.msra.mxu0 0.0
  %166 = vmatprep.subr.mxu0 0.0
  %167 = vmatpush2.msra.mxu0 0.0
  %168 = vmatprep.subr.mxu0 0.0
  %169 = vmatpush2.msra.mxu0 0.0
  %170 = vmatprep.subr.mxu0 0.0
  %171 = vmatpush2.msra.mxu0 0.0
  %172 = vmatprep.subr.mxu0 0.0
  %173 = vmatpush2.msra.mxu0 0.0
  %174 = vmatprep.subr.mxu0 0.0
  %175 = vmatpush2.msra.mxu0 0.0
  %176 = vmatprep.subr.mxu0 0.0
  %177 = vmatpush2.msra.mxu0 0.0
  %178 = vmatprep.subr.mxu0 0.0
  %179 = vmatpush2.msra.mxu0 0.0
  %180 = vmatprep.subr.mxu0 0.0
  %181 = vmatpush2.msra.mxu0 0.0
  %182 = vmatprep.mubr.f32.mxu0 0.0
  %183 = vmatmul.mubr.f32.gmra.mxu0 %v110
  %v184 = vpop.f32.mrf.mxu0
  %v185 = vadd.f32 %v96, %v184
  %v186 = vpop.f32.mrf.mxu0
  %187 = vmatprep.mubr.f32.mxu0 0.0
  %188 = vmatmul.mubr.f32.gmra.mxu0 %v113
  %v189 = vpop.f32.mrf.mxu0
  %v190 = vadd.f32 %v101, %v189
  %v191 = vpop.f32.mrf.mxu0
  %192 = vmatprep.mubr.f32.mxu0 0.0
  %193 = vmatmul.mubr.f32.gmra.mxu0 %v116
  %v194 = vpop.f32.mrf.mxu0
  %v195 = vadd.f32 %v106, %v194
  %v196 = vpop.f32.mrf.mxu0
  %197 = vdwg.mxu0
  %v198 = vrot.slane %v185, 4
  %v199 = vmax.f32 %v185, %v198
  %v200 = vrot.slane %v199, 2
  %v201 = vmax.f32 %v199, %v200
  %v202 = vrot.slane %v201, 1
  %v203 = vmax.f32 %v201, %v202
  %v204 = vsub.f32 %v185, %v203
  %v205 = vmul.f32 %v204, 1.442695
  %v206 = vpow.pop %v205
  %v207 = vrot.slane %v206, 4
  %v208 = vadd.f32 %v206, %v207
  %v209 = vrot.slane %v208, 2
  %v210 = vadd.f32 %v208, %v209
  %v211 = vrot.slane %v210, 1
  %v212 = vadd.f32 %v210, %v211
  %v213 = vrcp.pop %v212
  %v214 = vmul.f32 %v212, %v213
  %v215 = vsub.f32 2.0, %v214
  %v216 = vmul.f32 %v213, %v215
  %v217 = vmul.f32 %v212, %v216
  %v218 = vsub.f32 2.0, %v217
  %v219 = vmul.f32 %v216, %v218
  %v220 = vmul.f32 %v206, %v219
  %221 = vst [vmem:[%s5] sm:$0xff] %v220
  %222 = vst [vmem:[%s5 + $0x8] sm:$0xff] %v190
  %v223 = vmul.f32 %v195, 1.442695
  %v224 = vpow.pop %v223
  %225 = vst [vmem:[%s5 + $0x10] sm:$0xff] %v224
  // Predicated region
  $region22: #{mdn_forward.1} parent=0 // pred_check
    _
  $region23: #{mdn_forward.1} parent=0 // pred_check_branch
    %227 = sbr.rel (0) target = $region25
  $region24: #{mdn_forward.1} parent=0 // pred_region
    _
  $region25: #{mdn_forward.1} parent=0 // pred_fallthru
    _
  // Predicated region
  $region26: #{mdn_forward.1} parent=0 // pred_check
    _
  $region27: #{mdn_forward.1} parent=0 // pred_check_branch
    %229 = sbr.rel (0) target = $region29
  $region28: #{mdn_forward.1} parent=0 // pred_region
    _
  $region29: #{mdn_forward.1} parent=0 // pred_fallthru
    _

</llo_original>
